<compile_context>
chip_gen: v7x
topology: tpu7x:2x2x1
jax: 0.10.0
libtpu: 0.0.40
codegen_flags: <defaults>
</compile_context>

<pallas_src>
import functools
import math

import jax
import jax.numpy as jnp
from jax.experimental import pallas as pl
from jax.experimental.pallas import tpu as pltpu


# -----------------------------------------------------------------------------
# Kernel: fused p_mu / p_logvar MLPs + CLUB sampled upper bound (per-tile
# partial sums; final tiny reduction happens outside the kernel).
# -----------------------------------------------------------------------------
def club_kernel(x_ref, y_ref, yp_ref,
                w1_ref, w2_ref, b1_ref, b2_ref,
                out_ref, *, y_dim, tile_b, batch, mask_tail):
    # Layer 1 (both heads fused): x @ [W_mu1 | W_lv1] + [b_mu1 | b_lv1], ReLU
    x = x_ref[...].astype(jnp.bfloat16)
    h = jnp.dot(x, w1_ref[...], preferred_element_type=jnp.float32)
    h = jnp.maximum(h + b1_ref[...], 0.0).astype(jnp.bfloat16)

    # Layer 2 (both heads fused via block-diagonal weight): -> [mu | logvar_pre]
    a2 = jnp.dot(h, w2_ref[...], preferred_element_type=jnp.float32)
    a2 = a2 + b2_ref[...]
    mu = a2[:, :y_dim]
    logvar = jnp.tanh(a2[:, y_dim:])

    inv_var = jnp.exp(-logvar)                     # 1 / exp(logvar), bounded by e
    d_pos = mu - y_ref[...]
    d_neg = mu - yp_ref[...]
    #   positive - negative = (d_neg^2 - d_pos^2) * inv_var  (per element)
    contrib = (d_neg * d_neg - d_pos * d_pos) * inv_var      # (tile_b, y_dim) f32

    if mask_tail:  # static: only emitted when the grid does not divide batch
        row = (pl.program_id(0) * tile_b
               + jax.lax.broadcasted_iota(jnp.int32, (tile_b, 1), 0))
        contrib = jnp.where(row < batch, contrib, 0.0)

    # Partial sum over the batch tile using only vreg-wise VPU adds
    # (leading-axis reduction of a [tb/8, 8, y_dim] view; no XLU reduce here).
    out_ref[...] = contrib.reshape(tile_b // 8, 8, y_dim).sum(axis=0)


# -----------------------------------------------------------------------------
# Parameter fusion / packing (done once, outside the per-step hot path).
# -----------------------------------------------------------------------------
def prepare_params(w_mu1, b_mu1, w_mu2, b_mu2, w_lv1, b_lv1, w_lv2, b_lv2):
    x_dim, h2 = w_mu1.shape
    y_dim = w_mu2.shape[1]
    # Layer-1 weights side by side; layer-2 weights block-diagonal.
    w1 = jnp.concatenate([w_mu1, w_lv1], axis=1).astype(jnp.bfloat16)
    w2 = jnp.zeros((2 * h2, 2 * y_dim), jnp.float32)
    w2 = w2.at[:h2, :y_dim].set(w_mu2).at[h2:, y_dim:].set(w_lv2)
    w2 = w2.astype(jnp.bfloat16)
    b1 = jnp.concatenate([b_mu1, b_lv1]).reshape(1, 2 * h2).astype(jnp.float32)
    b2 = jnp.concatenate([b_mu2, b_lv2]).reshape(1, 2 * y_dim).astype(jnp.float32)
    return w1, w2, b1, b2


# -----------------------------------------------------------------------------
# Wrapper
# -----------------------------------------------------------------------------
def club_sample_forward(x_samples, y_samples, perm, fused_params, *,
                        tile_batch=None):
    """CLUBSample.forward(x_samples, y_samples) -> scalar upper bound."""
    w1, w2, b1, b2 = fused_params
    batch, x_dim = x_samples.shape
    y_dim = y_samples.shape[1]

    # host-side permutation gather (torch: y_samples[randperm(B)])
    y_perm = y_samples[perm]

    # Batch tile: large (amortizes per-step overhead), multiple of 8 sublanes.
    if tile_batch is None:
        tile_batch = min(2048, ((batch + 7) // 8) * 8)
    tb = max(8, (tile_batch // 8) * 8)
    num_tiles = -(-batch // tb)                 # cdiv; tail tile masked in-kernel
    mask_tail = (num_tiles * tb != batch)

    kernel = functools.partial(club_kernel, y_dim=y_dim, tile_b=tb,
                               batch=batch, mask_tail=mask_tail)

    partials = pl.pallas_call(
        kernel,
        out_shape=jax.ShapeDtypeStruct((num_tiles * 8, y_dim), jnp.float32),
        grid=(num_tiles,),
        in_specs=[
            pl.BlockSpec((tb, x_dim), lambda i: (i, 0)),     # x tile (streamed)
            pl.BlockSpec((tb, y_dim), lambda i: (i, 0)),     # y tile
            pl.BlockSpec((tb, y_dim), lambda i: (i, 0)),     # y[perm] tile
            pl.BlockSpec(w1.shape, lambda i: (0, 0)),        # fused W1 (resident)
            pl.BlockSpec(w2.shape, lambda i: (0, 0)),        # fused W2 (resident)
            pl.BlockSpec(b1.shape, lambda i: (0, 0)),        # packed layer-1 bias
            pl.BlockSpec(b2.shape, lambda i: (0, 0)),        # packed layer-2 bias
        ],
        out_specs=pl.BlockSpec((8, y_dim), lambda i: (i, 0)),  # per-step partials
        compiler_params=pltpu.CompilerParams(
            dimension_semantics=("parallel",)),   # no cross-step dependence
    )(x_samples, y_samples, y_perm, w1, w2, b1, b2)

    # Tiny epilogue: mean over batch, then / 2.0
    return jnp.sum(partials) * (0.5 / batch)


# -----------------------------------------------------------------------------
# Deterministic parameter init (PyTorch default nn.Linear: U(-1/sqrt(fan_in), .))
# -----------------------------------------------------------------------------
def linear_init(key, fan_in, fan_out):
    kw, kb = jax.random.split(key)
    bound = 1.0 / math.sqrt(fan_in)
    w = jax.random.uniform(kw, (fan_in, fan_out), jnp.float32, -bound, bound)
    b = jax.random.uniform(kb, (fan_out,), jnp.float32, -bound, bound)
    return w, b


# -----------------------------------------------------------------------------
# Pure-JAX reference (mirrors the PyTorch forward).  matmul_dtype=bf16 mirrors
# the kernel's MXU operand precision (accumulation stays f32 either way).
# -----------------------------------------------------------------------------
def club_sample_reference(x, y, perm, raw_params, matmul_dtype=jnp.float32):
    (w_mu1, b_mu1, w_mu2, b_mu2, w_lv1, b_lv1, w_lv2, b_lv2) = raw_params

    def lin(a, w, b):
        return jnp.dot(a.astype(matmul_dtype), w.astype(matmul_dtype),
                       preferred_element_type=jnp.float32) + b

    mu = lin(jax.nn.relu(lin(x, w_mu1, b_mu1)), w_mu2, b_mu2)
    logvar = jnp.tanh(lin(jax.nn.relu(lin(x, w_lv1, b_lv1)), w_lv2, b_lv2))
    yp = y[perm]
    positive = -(mu - y) ** 2 / jnp.exp(logvar)
    negative = -(mu - yp) ** 2 / jnp.exp(logvar)
    upper_bound = (positive.sum(-1) - negative.sum(-1)).mean()
    return upper_bound / 2.0


if __name__ == "__main__":
    # Shapes consistent with the module: CLUBSample(x_dim, y_dim, hidden_size)
    x_dim = 32
    y_dim = 16
    hidden_size = 64
    h2 = hidden_size // 2

    key = jax.random.PRNGKey(0)
    k_param, k_data = jax.random.split(key)
    k1, k2, k3, k4 = jax.random.split(k_param, 4)

    w_mu1, b_mu1 = linear_init(k1, x_dim, h2)
    w_mu2, b_mu2 = linear_init(k2, h2, y_dim)
    w_lv1, b_lv1 = linear_init(k3, x_dim, h2)
    w_lv2, b_lv2 = linear_init(k4, h2, y_dim)
    raw_params = (w_mu1, b_mu1, w_mu2, b_mu2, w_lv1, b_lv1, w_lv2, b_lv2)
    fused_params = prepare_params(*raw_params)

    # (batch, tile_batch) configs:
    #   (8, None): small single-tile case.
    #   (300, 128): exercises multi-tile grid + masked ragged tail (no padding).
    for batch, tile_batch in ((8, None), (300, 128)):
        kx, ky, kp, k_data = jax.random.split(k_data, 4)
        x = jax.random.normal(kx, (batch, x_dim), dtype=jnp.float32)
        y = jax.random.normal(ky, (batch, y_dim), dtype=jnp.float32)
        perm = jax.random.permutation(kp, batch)   # torch.randperm equivalent

        out = club_sample_forward(x, y, perm, fused_params, tile_batch=tile_batch)
        out = jax.block_until_ready(out)

        ref = club_sample_reference(x, y, perm, raw_params,
                                    matmul_dtype=jnp.bfloat16)
        assert out.shape == ()
        assert out.dtype == jnp.float32
        assert jnp.allclose(out, ref, atol=2e-4, rtol=2e-4), (batch, out, ref)

    print("KERNEL_OK")
</pallas_src>

<mosaic_0001>
module attributes {stable_mosaic.version = 11 : i64} {
  func.func @club_kernel(%arg0: i32, %arg1: memref<8x32xf32, #tpu.memory_space<vmem>>, %arg2: memref<8x16xf32, #tpu.memory_space<vmem>>, %arg3: memref<8x16xf32, #tpu.memory_space<vmem>>, %arg4: memref<32x64xbf16, #tpu.memory_space<vmem>>, %arg5: memref<64x32xbf16, #tpu.memory_space<vmem>>, %arg6: memref<1x64xf32, #tpu.memory_space<vmem>>, %arg7: memref<1x32xf32, #tpu.memory_space<vmem>>, %arg8: memref<8x16xf32, #tpu.memory_space<vmem>>) attributes {dimension_semantics = [#tpu.dimension_semantics<parallel>], iteration_bounds = array<i64: 1>, scalar_prefetch = 0 : i64, scratch_operands = 0 : i64, tpu.core_type = #tpu.core_type<tc>, window_params = [{transform_indices = @transform_0, window_bounds = array<i64: 8, 32>}, {transform_indices = @transform_1, window_bounds = array<i64: 8, 16>}, {transform_indices = @transform_2, window_bounds = array<i64: 8, 16>}, {pipeline_mode = #tpu.pipeline_mode<synchronous>, transform_indices = @transform_3, window_bounds = array<i64: 32, 64>}, {pipeline_mode = #tpu.pipeline_mode<synchronous>, transform_indices = @transform_4, window_bounds = array<i64: 64, 32>}, {pipeline_mode = #tpu.pipeline_mode<synchronous>, transform_indices = @transform_5, window_bounds = array<i64: 1, 64>}, {pipeline_mode = #tpu.pipeline_mode<synchronous>, transform_indices = @transform_6, window_bounds = array<i64: 1, 32>}, {transform_indices = @transform_7, window_bounds = array<i64: 8, 16>}]} {
    %c0 = arith.constant 0 : index
    %c0_0 = arith.constant 0 : index
    %0 = vector.load %arg1[%c0, %c0_0] : memref<8x32xf32, #tpu.memory_space<vmem>>, vector<8x32xf32>
    %1 = arith.truncf %0 : vector<8x32xf32> to vector<8x32xbf16>
    %c0_1 = arith.constant 0 : index
    %c0_2 = arith.constant 0 : index
    %2 = vector.load %arg4[%c0_1, %c0_2] : memref<32x64xbf16, #tpu.memory_space<vmem>>, vector<32x64xbf16>
    %cst = arith.constant dense<0.000000e+00> : vector<8x64xf32>
    %3 = tpu.matmul %1, %2, %cst {dimension_numbers = #tpu.dot_dimension_numbers<[1], [0], [0], [1], [0, 0, 1, 1], [], []>} : vector<8x32xbf16>, vector<32x64xbf16>, vector<8x64xf32> -> vector<8x64xf32>
    %c0_3 = arith.constant 0 : index
    %c0_4 = arith.constant 0 : index
    %4 = vector.load %arg6[%c0_3, %c0_4] : memref<1x64xf32, #tpu.memory_space<vmem>>, vector<1x64xf32>
    %5 = vector.broadcast %4 : vector<1x64xf32> to vector<8x64xf32>
    %6 = arith.addf %3, %5 : vector<8x64xf32>
    %cst_5 = arith.constant 0.000000e+00 : f32
    %7 = vector.broadcast %cst_5 : f32 to vector<8x64xf32>
    %8 = arith.maximumf %6, %7 : vector<8x64xf32>
    %9 = arith.truncf %8 : vector<8x64xf32> to vector<8x64xbf16>
    %c0_6 = arith.constant 0 : index
    %c0_7 = arith.constant 0 : index
    %10 = vector.load %arg5[%c0_6, %c0_7] : memref<64x32xbf16, #tpu.memory_space<vmem>>, vector<64x32xbf16>
    %cst_8 = arith.constant dense<0.000000e+00> : vector<8x32xf32>
    %11 = tpu.matmul %9, %10, %cst_8 {dimension_numbers = #tpu.dot_dimension_numbers<[1], [0], [0], [1], [0, 0, 1, 1], [], []>} : vector<8x64xbf16>, vector<64x32xbf16>, vector<8x32xf32> -> vector<8x32xf32>
    %c0_9 = arith.constant 0 : index
    %c0_10 = arith.constant 0 : index
    %12 = vector.load %arg7[%c0_9, %c0_10] : memref<1x32xf32, #tpu.memory_space<vmem>>, vector<1x32xf32>
    %13 = vector.broadcast %12 : vector<1x32xf32> to vector<8x32xf32>
    %14 = arith.addf %11, %13 : vector<8x32xf32>
    %15 = vector.extract_strided_slice %14 {offsets = [0, 0], sizes = [8, 16], strides = [1, 1]} : vector<8x32xf32> to vector<8x16xf32>
    %16 = vector.extract_strided_slice %14 {offsets = [0, 16], sizes = [8, 16], strides = [1, 1]} : vector<8x32xf32> to vector<8x16xf32>
    %17 = math.tanh %16 : vector<8x16xf32>
    %cst_11 = arith.constant 0.000000e+00 : f32
    %18 = vector.broadcast %cst_11 : f32 to vector<8x16xf32>
    %19 = arith.subf %18, %17 : vector<8x16xf32>
    %20 = math.exp %19 : vector<8x16xf32>
    %c0_12 = arith.constant 0 : index
    %c0_13 = arith.constant 0 : index
    %21 = vector.load %arg2[%c0_12, %c0_13] : memref<8x16xf32, #tpu.memory_space<vmem>>, vector<8x16xf32>
    %22 = arith.subf %15, %21 : vector<8x16xf32>
    %c0_14 = arith.constant 0 : index
    %c0_15 = arith.constant 0 : index
    %23 = vector.load %arg3[%c0_14, %c0_15] : memref<8x16xf32, #tpu.memory_space<vmem>>, vector<8x16xf32>
    %24 = arith.subf %15, %23 : vector<8x16xf32>
    %25 = arith.mulf %24, %24 : vector<8x16xf32>
    %26 = arith.mulf %22, %22 : vector<8x16xf32>
    %27 = arith.subf %25, %26 : vector<8x16xf32>
    %28 = arith.mulf %27, %20 : vector<8x16xf32>
    %29 = vector.shape_cast %28 : vector<8x16xf32> to vector<1x8x16xf32>
    %cst_16 = arith.constant dense<0.000000e+00> : vector<8x16xf32>
    %30 = vector.multi_reduction <add>, %29, %cst_16 [0] : vector<1x8x16xf32> to vector<8x16xf32>
    %c0_17 = arith.constant 0 : index
    %c0_18 = arith.constant 0 : index
    %31 = vector.load %arg8[%c0_17, %c0_18] : memref<8x16xf32, #tpu.memory_space<vmem>>, vector<8x16xf32>
    tpu.vector_store %arg8[%c0_17, %c0_18], %30 {strides = array<i32>} : memref<8x16xf32, #tpu.memory_space<vmem>>, vector<8x16xf32>,
    return
  }
  func.func @transform_0(%arg0: i32) -> (i32, i32) {
    %c0_i32 = arith.constant 0 : i32
    %c0_i32_0 = arith.constant 0 : i32
    return %arg0, %c0_i32 : i32, i32
  }
  func.func @transform_1(%arg0: i32) -> (i32, i32) {
    %c0_i32 = arith.constant 0 : i32
    %c0_i32_0 = arith.constant 0 : i32
    return %arg0, %c0_i32 : i32, i32
  }
  func.func @transform_2(%arg0: i32) -> (i32, i32) {
    %c0_i32 = arith.constant 0 : i32
    %c0_i32_0 = arith.constant 0 : i32
    return %arg0, %c0_i32 : i32, i32
  }
  func.func @transform_3(%arg0: i32) -> (i32, i32) {
    %c0_i32 = arith.constant 0 : i32
    %c0_i32_0 = arith.constant 0 : i32
    %c0_i32_1 = arith.constant 0 : i32
    return %c0_i32, %c0_i32_0 : i32, i32
  }
  func.func @transform_4(%arg0: i32) -> (i32, i32) {
    %c0_i32 = arith.constant 0 : i32
    %c0_i32_0 = arith.constant 0 : i32
    %c0_i32_1 = arith.constant 0 : i32
    return %c0_i32, %c0_i32_0 : i32, i32
  }
  func.func @transform_5(%arg0: i32) -> (i32, i32) {
    %c0_i32 = arith.constant 0 : i32
    %c0_i32_0 = arith.constant 0 : i32
    %c0_i32_1 = arith.constant 0 : i32
    return %c0_i32, %c0_i32_0 : i32, i32
  }
  func.func @transform_6(%arg0: i32) -> (i32, i32) {
    %c0_i32 = arith.constant 0 : i32
    %c0_i32_0 = arith.constant 0 : i32
    %c0_i32_1 = arith.constant 0 : i32
    return %c0_i32, %c0_i32_0 : i32, i32
  }
  func.func @transform_7(%arg0: i32) -> (i32, i32) {
    %c0_i32 = arith.constant 0 : i32
    %c0_i32_0 = arith.constant 0 : i32
    return %arg0, %c0_i32 : i32, i32
  }
}

</mosaic_0001>

<llo_original>
// kernel: tpu_custom_call.1
$region0: #{tpu_custom_call.1}
  #allocation0 [shape = 'u32[]', space=smem, size = 0x4, offset = 0x4, fixed_abs, tag = 'smem constant byte address 0x4 - core index']
  #allocation1 [shape = 'u32[144,128]{1,0:T(1,128)}', space=vmem, size = 0x12000, scoped, tag = 'internal scratch']
  %s0 = inlined_call_operand.vmem [shape: f32[8,32], index: 0, kind: input, shape index: {}]
  %s1 = inlined_call_operand.vmem [shape: f32[8,16], index: 1, kind: input, shape index: {}]
  %s2 = inlined_call_operand.vmem [shape: f32[8,16], index: 2, kind: input, shape index: {}]
  %s3 = inlined_call_operand.vmem [shape: bf16[32,64], index: 3, kind: input, shape index: {}]
  %s4 = inlined_call_operand.vmem [shape: bf16[64,32], index: 4, kind: input, shape index: {}]
  %s5 = inlined_call_operand.vmem [shape: f32[1,64], index: 5, kind: input, shape index: {}]
  %s6 = inlined_call_operand.vmem [shape: f32[1,32], index: 6, kind: input, shape index: {}]
  %s7 = inlined_call_operand.hbm [shape: f32[8,16], index: 7, kind: output, shape index: {}]
  %s8 = sld [smem:[#allocation0]]
  $region38: #{tpu_custom_call.1} parent=0
    _
  %s10 = ssub.s32 1, %s8
  %s11 = scalar_select 0, %s10, %s8
  $region1: #{tpu_custom_call.1} parent=0
    #allocation2 [shape = 'u8[4096]{0}', space=vmem, size = 0x1000, scoped, tag = 'output window, operand 0, single buffered']
    #allocation3 [shape = 's32[1]{0}', space=sflag, size = 0x4, scoped, tag = 'scoped memory for tpu_custom_call.1']
    %12 = vsyncpa [#allocation3], 0
    // Predicated region
    $region2: #{tpu_custom_call.1} parent=1 // pred_check
      _
    $region3: #{tpu_custom_call.1} parent=1 // pred_check_branch
      %14 = sbr.rel (0) target = $region5
    $region4: #{tpu_custom_call.1} parent=1 // pred_region
      _
    $region5: #{tpu_custom_call.1} parent=1 // pred_fallthru
      _
    // Predicated region
    $region6: #{tpu_custom_call.1} parent=1 // pred_check
      _
    $region7: #{tpu_custom_call.1} parent=1 // pred_check_branch
      %16 = sbr.rel (0) target = $region9
    $region8: #{tpu_custom_call.1} parent=1 // pred_region
      _
    $region9: #{tpu_custom_call.1} parent=1 // pred_fallthru
      _
    // Predicated region
    $region10: #{tpu_custom_call.1} parent=1 // pred_check
      _
    $region11: #{tpu_custom_call.1} parent=1 // pred_check_branch
      %18 = sbr.rel (0) target = $region13
    $region12: #{tpu_custom_call.1} parent=1 // pred_region
      _
    $region13: #{tpu_custom_call.1} parent=1 // pred_fallthru
      _
    // Predicated region
    $region14: #{tpu_custom_call.1} parent=1 // pred_check
      _
    $region15: #{tpu_custom_call.1} parent=1 // pred_check_branch
      %20 = sbr.rel (0) target = $region17
    $region16: #{tpu_custom_call.1} parent=1 // pred_region
      _
    $region17: #{tpu_custom_call.1} parent=1 // pred_fallthru
      _
    // Predicated region
    $region18: #{tpu_custom_call.1} parent=1 // pred_check
      _
    $region19: #{tpu_custom_call.1} parent=1 // pred_check_branch
      %22 = sbr.rel (0) target = $region21
    $region20: #{tpu_custom_call.1} parent=1 // pred_region
      _
    $region21: #{tpu_custom_call.1} parent=1 // pred_fallthru
      _
    // Predicated region
    $region22: #{tpu_custom_call.1} parent=1 // pred_check
      _
    $region23: #{tpu_custom_call.1} parent=1 // pred_check_branch
      %24 = sbr.rel (0) target = $region25
    $region24: #{tpu_custom_call.1} parent=1 // pred_region
      _
    $region25: #{tpu_custom_call.1} parent=1 // pred_fallthru
      _
    // Predicated region
    $region26: #{tpu_custom_call.1} parent=1 // pred_check
      _
    $region27: #{tpu_custom_call.1} parent=1 // pred_check_branch
      %26 = sbr.rel (0) target = $region29
    $region28: #{tpu_custom_call.1} parent=1 // pred_region
      _
    $region29: #{tpu_custom_call.1} parent=1 // pred_fallthru
      _
    %v28 = vld [vmem:[%s0] sm:$0xff]
    %v29 = vpack.c.bf16 %v28, %v28
    %v30 = vld [vmem:[%s3] sm:$0xf]
    %v31 = vld [vmem:[%s3 + $0x4] sm:$0xf]
    %v32 = vld [vmem:[%s3 + $0x8] sm:$0xf]
    %v33 = vld [vmem:[%s3 + $0xc] sm:$0xf]
    %v34 = vld [vmem:[%s5] sm:$0x1]
    %v36 = vlaneseq
    %v37 = vshrl.u32 %v36, 7
    %v38 = vsub.s32 0, %v37
    %v39 = vrot.slane %v34, %v38
    %v45 = vunpack.c.l.b16 %v30
    %v46 = vunpack.c.l.b16 %v31
    %v47 = vunpack.c.l.b16 %v32
    %v48 = vunpack.c.l.b16 %v33
    %v49 = vpack.c.b16 %v46, %v45
    %v50 = vpack.c.b16 %v48, %v47
    %vm53 = vcmask 261120
    %v55 = vsel %vm53, %v29, 0
    %57 = vmatprep.subr.bf16.mxu0 0
    %58 = vmatpush1.bf16.msra.mxu0 %v49
    %59 = vmatprep.subr.bf16.mxu0 0
    %60 = vmatpush1.bf16.msra.mxu0 %v50
    %61 = vmatprep.subr.bf16.mxu0 0
    %62 = vmatpush1.bf16.msra.mxu0 0
    %63 = vmatprep.subr.bf16.mxu0 0
    %64 = vmatpush1.bf16.msra.mxu0 0
    %65 = vmatprep.subr.bf16.mxu0 0
    %66 = vmatpush1.bf16.msra.mxu0 0
    %67 = vmatprep.subr.bf16.mxu0 0
    %68 = vmatpush1.bf16.msra.mxu0 0
    %69 = vmatprep.subr.bf16.mxu0 0
    %70 = vmatpush1.bf16.msra.mxu0 0
    %71 = vmatprep.subr.bf16.mxu0 0
    %72 = vmatpush1.bf16.msra.mxu0 0
    %73 = vmatprep.subr.bf16.mxu0 0
    %74 = vmatpush1.bf16.msra.mxu0 0
    %75 = vmatprep.subr.bf16.mxu0 0
    %76 = vmatpush1.bf16.msra.mxu0 0
    %77 = vmatprep.subr.bf16.mxu0 0
    %78 = vmatpush1.bf16.msra.mxu0 0
    %79 = vmatprep.subr.bf16.mxu0 0
    %80 = vmatpush1.bf16.msra.mxu0 0
    %81 = vmatprep.subr.bf16.mxu0 0
    %82 = vmatpush1.bf16.msra.mxu0 0
    %83 = vmatprep.subr.bf16.mxu0 0
    %84 = vmatpush1.bf16.msra.mxu0 0
    %85 = vmatprep.subr.bf16.mxu0 0
    %86 = vmatpush1.bf16.msra.mxu0 0
    %87 = vmatprep.subr.bf16.mxu0 0
    %88 = vmatpush1.bf16.msra.mxu0 0
    %89 = vmatprep.mubr.bf16.mxu0 0
    %90 = vmatmul.mubr.bf16.gmra.mrb[0].mxu0 %v55
    %v91 = vpop.f32.mrb[0].mxu0
    %v92 = vadd.f32 %v39, %v91
    %v93 = vpop.f32.mrb[0].mxu0
    %v94 = vpop.f32.mrb[0].mxu0
    %v95 = vpop.f32.mrb[0].mxu0
    %96 = vdwg.mxu0
    %v97 = vmax.f32 %v92, 0.0
    %v98 = vpack.c.bf16 %v97, %v97
    %v99 = vld [vmem:[%s4] sm:$0xf]
    %v100 = vld [vmem:[%s4 + $0x4] sm:$0xf]
    %v101 = vld [vmem:[%s4 + $0x8] sm:$0xf]
    %v102 = vld [vmem:[%s4 + $0xc] sm:$0xf]
    %v103 = vld [vmem:[%s4 + $0x10] sm:$0xf]
    %v104 = vld [vmem:[%s4 + $0x14] sm:$0xf]
    %v105 = vld [vmem:[%s4 + $0x18] sm:$0xf]
    %v106 = vld [vmem:[%s4 + $0x1c] sm:$0xf]
    %v107 = vld [vmem:[%s6] sm:$0x1]
    %v109 = vlaneseq
    %v110 = vshrl.u32 %v109, 7
    %v111 = vsub.s32 0, %v110
    %v112 = vrot.slane %v107, %v111
    %v122 = vunpack.c.l.b16 %v99
    %v123 = vunpack.c.l.b16 %v100
    %v124 = vunpack.c.l.b16 %v101
    %v125 = vunpack.c.l.b16 %v102
    %v126 = vunpack.c.l.b16 %v103
    %v127 = vunpack.c.l.b16 %v104
    %v128 = vunpack.c.l.b16 %v105
    %v129 = vunpack.c.l.b16 %v106
    %v130 = vpack.c.b16 %v123, %v122
    %v131 = vpack.c.b16 %v125, %v124
    %v132 = vpack.c.b16 %v127, %v126
    %v133 = vpack.c.b16 %v129, %v128
    %vm138 = vcmask 523264
    %v140 = vsel %vm138, %v98, 0
    %142 = vmatprep.subr.bf16.mxu0 0
    %143 = vmatpush1.bf16.msra.mxu0 %v130
    %144 = vmatprep.subr.bf16.mxu0 0
    %145 = vmatpush1.bf16.msra.mxu0 %v131
    %146 = vmatprep.subr.bf16.mxu0 0
    %147 = vmatpush1.bf16.msra.mxu0 %v132
    %148 = vmatprep.subr.bf16.mxu0 0
    %149 = vmatpush1.bf16.msra.mxu0 %v133
    %150 = vmatprep.subr.bf16.mxu0 0
    %151 = vmatpush1.bf16.msra.mxu0 0
    %152 = vmatprep.subr.bf16.mxu0 0
    %153 = vmatpush1.bf16.msra.mxu0 0
    %154 = vmatprep.subr.bf16.mxu0 0
    %155 = vmatpush1.bf16.msra.mxu0 0
    %156 = vmatprep.subr.bf16.mxu0 0
    %157 = vmatpush1.bf16.msra.mxu0 0
    %158 = vmatprep.subr.bf16.mxu0 0
    %159 = vmatpush1.bf16.msra.mxu0 0
    %160 = vmatprep.subr.bf16.mxu0 0
    %161 = vmatpush1.bf16.msra.mxu0 0
    %162 = vmatprep.subr.bf16.mxu0 0
    %163 = vmatpush1.bf16.msra.mxu0 0
    %164 = vmatprep.subr.bf16.mxu0 0
    %165 = vmatpush1.bf16.msra.mxu0 0
    %166 = vmatprep.subr.bf16.mxu0 0
    %167 = vmatpush1.bf16.msra.mxu0 0
    %168 = vmatprep.subr.bf16.mxu0 0
    %169 = vmatpush1.bf16.msra.mxu0 0
    %170 = vmatprep.subr.bf16.mxu0 0
    %171 = vmatpush1.bf16.msra.mxu0 0
    %172 = vmatprep.subr.bf16.mxu0 0
    %173 = vmatpush1.bf16.msra.mxu0 0
    %174 = vmatprep.mubr.bf16.mxu0 0
    %175 = vmatmul.mubr.bf16.gmra.mrb[0].mxu0 %v140
    %v176 = vpop.f32.mrb[0].mxu0
    %v177 = vadd.f32 %v112, %v176
    %v178 = vpop.f32.mrb[0].mxu0
    %v179 = vpop.f32.mrb[0].mxu0
    %v180 = vpop.f32.mrb[0].mxu0
    %181 = vdwg.mxu0
    %v182 = vtanh.pop %v177
    %v183 = vsub.f32 0.0, %v182
    %v184 = vmul.f32 %v183, 1.442695
    %v185 = vpow.pop %v184
    %v186 = vld [vmem:[%s1] sm:$0xff]
    %v187 = vsub.f32 %v177, %v186
    %v188 = vld [vmem:[%s2] sm:$0xff]
    %v189 = vsub.f32 %v177, %v188
    %v190 = vmul.f32 %v189, %v189
    %v191 = vmul.f32 %v187, %v187
    %v192 = vsub.f32 %v190, %v191
    %194 = vrot.lane.b32.xlu0 %v185, 112
    %v195 = vpop.permute.xlu0 %194
    %v197 = vmul.f32 %v192, %v195
    %v198 = vadd.f32 %v197, 0.0
    %vm199 = vcmask 130048
    %200 = vst.msk [vmem:[#allocation2] sm:$0xff] %vm199, %v198
    // Predicated region
    $region30: #{tpu_custom_call.1} parent=1 // pred_check
      _
    $region31: #{tpu_custom_call.1} parent=1 // pred_check_branch
      %202 = sbr.rel (0) target = $region33
    $region32: #{tpu_custom_call.1} parent=1 // pred_region
      %s204 = ssub.s32 128, 128
      %205 = vsyncadd [#allocation3], %s204
      %s207 = sshll.u32 [#allocation2], 4
      %s208 = int_to_ptr.vmem [resolvable:$true] %s207
      %210 = dma.vmem_to_hbm [thread:$0]  %s208, 128, %s7, [#allocation3]
    $region33: #{tpu_custom_call.1} parent=1 // pred_fallthru
      _
    // Predicated region
    $region34: #{tpu_custom_call.1} parent=1 // pred_check
      _
    $region35: #{tpu_custom_call.1} parent=1 // pred_check_branch
      %212 = sbr.rel (0) target = $region37
    $region36: #{tpu_custom_call.1} parent=1 // pred_region
      %213 = dma.done [#allocation3], 128
    $region37: #{tpu_custom_call.1} parent=1 // pred_fallthru
      _
    %214 = vsyncpa [#allocation3], 1

</llo_original>
